<compile_context>
chip_gen: v6e
topology: v6e:2x2x1
jax: 0.10.0
libtpu: 0.0.40
codegen_flags: <defaults>
</compile_context>

<pallas_src>
import functools

import jax
import jax.numpy as jnp
import numpy as np
from jax import lax
from jax.experimental import pallas as pl
from jax.experimental.pallas import tpu as pltpu


def _pick_bt(B, Cin, Cout):
    """Smallest batch group that fills the 8 vreg sublanes while keeping every
    block either (8,128)-aligned or full-extent."""
    for bt in range(1, B + 1):
        if B % bt == 0 and (bt * Cin) % 8 == 0 and (bt * Cout) % 8 == 0:
            return bt
    return B  # single step, full-extent blocks (always legal)


def _dwsep_kernel(x_ref, dw_ref, pw_ref, pb_ref, o_ref, *,
                  H, W, Cin, Cout, K, pad, Bt):
    # x_ref : (Bt*Cin, HW)   Bt images stacked on sublanes, pixels on lanes
    # dw_ref: (Bt*Cin, K*K)  depthwise taps, one row per (image, channel)
    # pw_ref: (Cout, Cin)    pointwise weights
    # pb_ref: (Cout, 1)      pointwise bias (depthwise bias already folded in)
    # o_ref : (Bt*Cout, HW)  lane-dense NCHW-flat output
    HW = H * W
    x = x_ref[...].astype(jnp.float32)            # upcast after DMA (bf16 I/O ok)

    # ---- hoisted border masks over the flat pixel axis (pad=1 handled here) ----
    pos = lax.broadcasted_iota(jnp.int32, (1, HW), 1)
    need_col = any((dx - pad) != 0 for dx in range(K))
    col = (pos % W) if need_col else None         # single integer mod in the kernel
    row_mask, col_mask = {}, {}
    for dy in range(K):
        ry = dy - pad
        if ry < 0:
            row_mask[ry] = pos >= (-ry) * W       # row >= -ry, no divide needed
        elif ry > 0:
            row_mask[ry] = pos < (H - ry) * W     # row <  H - ry
    for dx in range(K):
        rx = dx - pad
        if rx < 0:
            col_mask[rx] = col >= -rx
        elif rx > 0:
            col_mask[rx] = col < W - rx

    # ---- depthwise KxK: XLU lane rolls + per-row broadcast FMAs on the VPU ----
    acc = None
    for dy in range(K):
        ry = dy - pad
        for dx in range(K):
            rx = dx - pad
            off = ry * W + rx                     # flat-index shift of this tap
            tap = x if off == 0 else pltpu.roll(x, shift=(-off) % HW, axis=1)
            m = row_mask.get(ry)
            cm = col_mask.get(rx)
            if cm is not None:
                m = cm if m is None else jnp.logical_and(m, cm)
            if m is not None:
                tap = jnp.where(m, tap, 0.0)      # zero-pad semantics
            w_t = dw_ref[:, dy * K + dx:dy * K + dx + 1]   # (Bt*Cin, 1)
            term = tap * w_t                      # (Bt*Cin, HW) VPU FMA
            acc = term if acc is None else acc + term      # first tap seeds acc

    # ---- pointwise 1x1 + bias + ReLU, per image in the sublane-folded batch ----
    pw = pw_ref[...]                              # (Cout, Cin) f32
    pb = pb_ref[...]                              # (Cout, 1)  f32
    use_mxu = Cin >= 16                           # MXU at production Cin=128
    for b in range(Bt):
        a_b = acc[b * Cin:(b + 1) * Cin, :]       # (Cin, HW)
        if use_mxu:
            yb = jnp.dot(pw, a_b, preferred_element_type=jnp.float32)
        else:                                     # tiny-Cin VPU broadcast-FMA path
            yb = pw[:, 0:1] * a_b[0:1, :]
            for ci in range(1, Cin):
                yb = yb + pw[:, ci:ci + 1] * a_b[ci:ci + 1, :]
        o_ref[b * Cout:(b + 1) * Cout, :] = (
            jnp.maximum(yb + pb, 0.0).astype(o_ref.dtype))   # unmasked lane-dense


def depthwise_separable_conv(x_nchw, dw_w, dw_b, pw_w, pw_b, *,
                             kernel_size=3, padding=1):
    """x_nchw: (B, Cin, H, W); dw_w: (Cin, 1, K, K); dw_b: (Cin,);
    pw_w: (Cout, Cin, 1, 1); pw_b: (Cout,).  Returns (B, Cout, H, W) NCHW."""
    B, Cin, H, W = x_nchw.shape
    K = kernel_size
    Cout = pw_w.shape[0]
    HW = H * W

    Bt = _pick_bt(B, Cin, Cout)                   # demo: Bt=2 -> grid=(1,)
    G = B // Bt

    # Activations: free reshape only — no pad, no transpose, no dtype copy.
    x2 = x_nchw.reshape(B * Cin, HW)

    f32 = jnp.float32
    dw2 = jnp.tile(dw_w[:, 0, :, :].reshape(Cin, K * K).astype(f32), (Bt, 1))
    pw2 = pw_w[:, :, 0, 0].astype(f32)            # (Cout, Cin)
    # Exact fold of the depthwise bias into the pointwise bias.
    pb2 = (pw2 @ dw_b.astype(f32) + pw_b.astype(f32)).reshape(Cout, 1)

    kernel = functools.partial(_dwsep_kernel, H=H, W=W, Cin=Cin, Cout=Cout,
                               K=K, pad=padding, Bt=Bt)

    out2 = pl.pallas_call(
        kernel,
        out_shape=jax.ShapeDtypeStruct((B * Cout, HW), x_nchw.dtype),
        grid_spec=pltpu.PrefetchScalarGridSpec(
            num_scalar_prefetch=0,
            grid=(G,),
            in_specs=[
                pl.BlockSpec((Bt * Cin, HW), lambda g: (g, 0)),
                pl.BlockSpec((Bt * Cin, K * K), lambda g: (0, 0)),
                pl.BlockSpec((Cout, Cin), lambda g: (0, 0)),
                pl.BlockSpec((Cout, 1), lambda g: (0, 0)),
            ],
            out_specs=pl.BlockSpec((Bt * Cout, HW), lambda g: (g, 0)),
        ),
        # TODO(synk): for production block3 (Cin=Cout=128, ~55x55) add a
        # channel-group / H-tile grid axis and set vmem_limit_bytes for v7x's
        # 64 MiB per-TC VMEM; not needed at this tile size.
        compiler_params=pltpu.CompilerParams(dimension_semantics=("parallel",)),
    )(x2, dw2, pw2, pb2)

    # Splitting the row/lane dims back out is a free reshape — already NCHW.
    return out2.reshape(B, Cout, H, W)


def _reference(x, dw_w, dw_b, pw_w, pw_b, padding=1):
    # Pure-JAX reference mirroring torch Conv2d semantics.
    Cin = x.shape[1]
    y = lax.conv_general_dilated(
        x, dw_w, window_strides=(1, 1), padding=[(padding, padding)] * 2,
        dimension_numbers=("NCHW", "OIHW", "NCHW"), feature_group_count=Cin)
    y = y + dw_b.reshape(1, -1, 1, 1)
    z = lax.conv_general_dilated(
        y, pw_w, window_strides=(1, 1), padding="VALID",
        dimension_numbers=("NCHW", "OIHW", "NCHW"))
    z = z + pw_b.reshape(1, -1, 1, 1)
    return jnp.maximum(z, 0.0)


if __name__ == "__main__":
    B, Cin, Cout, H, W, K = 2, 4, 8, 16, 16, 3
    key = jax.random.PRNGKey(0)
    kx, k1, k2, k3, k4 = jax.random.split(key, 5)

    x = jax.random.normal(kx, (B, Cin, H, W), dtype=jnp.float32)
    dw_w = 0.1 * jax.random.normal(k1, (Cin, 1, K, K), dtype=jnp.float32)     # depthwise w
    dw_b = 0.1 * jax.random.normal(k2, (Cin,), dtype=jnp.float32)             # depthwise b
    pw_w = 0.1 * jax.random.normal(k3, (Cout, Cin, 1, 1), dtype=jnp.float32)  # pointwise w
    pw_b = 0.1 * jax.random.normal(k4, (Cout,), dtype=jnp.float32)            # pointwise b

    out = depthwise_separable_conv(x, dw_w, dw_b, pw_w, pw_b, kernel_size=K, padding=1)
    out = jax.block_until_ready(out)

    ref = jax.block_until_ready(_reference(x, dw_w, dw_b, pw_w, pw_b, padding=1))
    np.testing.assert_allclose(np.asarray(out), np.asarray(ref), rtol=1e-4, atol=1e-4)

    print("KERNEL_OK")
</pallas_src>

<mosaic_0001>
module attributes {stable_mosaic.version = 11 : i64} {
  func.func @_dwsep_kernel(%arg0: i32, %arg1: memref<8x256xf32, #tpu.memory_space<vmem>>, %arg2: memref<8x9xf32, #tpu.memory_space<vmem>>, %arg3: memref<8x4xf32, #tpu.memory_space<vmem>>, %arg4: memref<8x1xf32, #tpu.memory_space<vmem>>, %arg5: memref<16x256xf32, #tpu.memory_space<vmem>>) attributes {dimension_semantics = [#tpu.dimension_semantics<parallel>], iteration_bounds = array<i64: 1>, scalar_prefetch = 0 : i64, scratch_operands = 0 : i64, tpu.core_type = #tpu.core_type<tc>, window_params = [{transform_indices = @transform_0, window_bounds = array<i64: 8, 256>}, {pipeline_mode = #tpu.pipeline_mode<synchronous>, transform_indices = @transform_1, window_bounds = array<i64: 8, 9>}, {pipeline_mode = #tpu.pipeline_mode<synchronous>, transform_indices = @transform_2, window_bounds = array<i64: 8, 4>}, {pipeline_mode = #tpu.pipeline_mode<synchronous>, transform_indices = @transform_3, window_bounds = array<i64: 8, 1>}, {transform_indices = @transform_4, window_bounds = array<i64: 16, 256>}]} {
    %c0 = arith.constant 0 : index
    %c0_0 = arith.constant 0 : index
    %0 = vector.load %arg1[%c0, %c0_0] : memref<8x256xf32, #tpu.memory_space<vmem>>, vector<8x256xf32>
    %1 = tpu.iota {dimensions = array<i32: 1>} : vector<1x256xi32>
    %c16_i32 = arith.constant 16 : i32
    %c0_i32 = arith.constant 0 : i32
    %2 = arith.cmpi eq, %c16_i32, %c0_i32 : i32
    %c1_i32 = arith.constant 1 : i32
    %3 = arith.select %2, %c1_i32, %c16_i32 : i32
    %4 = vector.broadcast %3 : i32 to vector<1x256xi32>
    %5 = arith.remsi %1, %4 : vector<1x256xi32>
    %c0_i32_1 = arith.constant 0 : i32
    %6 = vector.broadcast %c0_i32_1 : i32 to vector<1x256xi32>
    %7 = arith.cmpi ne, %5, %6 : vector<1x256xi32>
    %c0_i32_2 = arith.constant 0 : i32
    %8 = vector.broadcast %c0_i32_2 : i32 to vector<1x256xi32>
    %9 = arith.cmpi slt, %5, %8 : vector<1x256xi32>
    %c0_i32_3 = arith.constant 0 : i32
    %10 = arith.cmpi slt, %3, %c0_i32_3 : i32
    %11 = vector.broadcast %10 : i1 to vector<1x256xi1>
    %12 = vector.broadcast %11 : vector<1x256xi1> to vector<1x256xi1>
    %13 = arith.xori %9, %12 : vector<1x256xi1>
    %14 = arith.andi %13, %7 : vector<1x256xi1>
    %15 = vector.broadcast %3 : i32 to vector<1x256xi32>
    %16 = arith.addi %5, %15 : vector<1x256xi32>
    %17 = arith.select %14, %16, %5 : vector<1x256xi1>, vector<1x256xi32>
    %c16_i32_4 = arith.constant 16 : i32
    %18 = vector.broadcast %c16_i32_4 : i32 to vector<1x256xi32>
    %19 = arith.cmpi sge, %1, %18 : vector<1x256xi32>
    %c240_i32 = arith.constant 240 : i32
    %20 = vector.broadcast %c240_i32 : i32 to vector<1x256xi32>
    %21 = arith.cmpi slt, %1, %20 : vector<1x256xi32>
    %c1_i32_5 = arith.constant 1 : i32
    %22 = vector.broadcast %c1_i32_5 : i32 to vector<1x256xi32>
    %23 = arith.cmpi sge, %17, %22 : vector<1x256xi32>
    %c15_i32 = arith.constant 15 : i32
    %24 = vector.broadcast %c15_i32 : i32 to vector<1x256xi32>
    %25 = arith.cmpi slt, %17, %24 : vector<1x256xi32>
    %c17_i32 = arith.constant 17 : i32
    %26 = tpu.dynamic_rotate %0 by %c17_i32 dim 1 : vector<8x256xf32>, i32 -> vector<8x256xf32>
    %27 = arith.andi %19, %23 : vector<1x256xi1>
    %cst = arith.constant 0.000000e+00 : f32
    %28 = vector.shape_cast %27 : vector<1x256xi1> to vector<1x256xi1>
    %29 = vector.broadcast %28 : vector<1x256xi1> to vector<8x256xi1>
    %30 = vector.broadcast %cst : f32 to vector<8x256xf32>
    %31 = arith.select %29, %26, %30 : vector<8x256xi1>, vector<8x256xf32>
    %c0_6 = arith.constant 0 : index
    %c0_7 = arith.constant 0 : index
    %32 = vector.load %arg2[%c0_6, %c0_7] : memref<8x9xf32, #tpu.memory_space<vmem>>, vector<8x1xf32>
    %33 = vector.broadcast %32 : vector<8x1xf32> to vector<8x256xf32>
    %34 = arith.mulf %31, %33 : vector<8x256xf32>
    %c16_i32_8 = arith.constant 16 : i32
    %35 = tpu.dynamic_rotate %0 by %c16_i32_8 dim 1 : vector<8x256xf32>, i32 -> vector<8x256xf32>
    %cst_9 = arith.constant 0.000000e+00 : f32
    %36 = vector.shape_cast %19 : vector<1x256xi1> to vector<1x256xi1>
    %37 = vector.broadcast %36 : vector<1x256xi1> to vector<8x256xi1>
    %38 = vector.broadcast %cst_9 : f32 to vector<8x256xf32>
    %39 = arith.select %37, %35, %38 : vector<8x256xi1>, vector<8x256xf32>
    %c0_10 = arith.constant 0 : index
    %c1 = arith.constant 1 : index
    %40 = vector.load %arg2[%c0_10, %c1] : memref<8x9xf32, #tpu.memory_space<vmem>>, vector<8x1xf32>
    %41 = vector.broadcast %40 : vector<8x1xf32> to vector<8x256xf32>
    %42 = arith.mulf %39, %41 : vector<8x256xf32>
    %43 = arith.addf %34, %42 : vector<8x256xf32>
    %c15_i32_11 = arith.constant 15 : i32
    %44 = tpu.dynamic_rotate %0 by %c15_i32_11 dim 1 : vector<8x256xf32>, i32 -> vector<8x256xf32>
    %45 = arith.andi %19, %25 : vector<1x256xi1>
    %cst_12 = arith.constant 0.000000e+00 : f32
    %46 = vector.shape_cast %45 : vector<1x256xi1> to vector<1x256xi1>
    %47 = vector.broadcast %46 : vector<1x256xi1> to vector<8x256xi1>
    %48 = vector.broadcast %cst_12 : f32 to vector<8x256xf32>
    %49 = arith.select %47, %44, %48 : vector<8x256xi1>, vector<8x256xf32>
    %c0_13 = arith.constant 0 : index
    %c2 = arith.constant 2 : index
    %50 = vector.load %arg2[%c0_13, %c2] : memref<8x9xf32, #tpu.memory_space<vmem>>, vector<8x1xf32>
    %51 = vector.broadcast %50 : vector<8x1xf32> to vector<8x256xf32>
    %52 = arith.mulf %49, %51 : vector<8x256xf32>
    %53 = arith.addf %43, %52 : vector<8x256xf32>
    %c1_i32_14 = arith.constant 1 : i32
    %54 = tpu.dynamic_rotate %0 by %c1_i32_14 dim 1 : vector<8x256xf32>, i32 -> vector<8x256xf32>
    %cst_15 = arith.constant 0.000000e+00 : f32
    %55 = vector.shape_cast %23 : vector<1x256xi1> to vector<1x256xi1>
    %56 = vector.broadcast %55 : vector<1x256xi1> to vector<8x256xi1>
    %57 = vector.broadcast %cst_15 : f32 to vector<8x256xf32>
    %58 = arith.select %56, %54, %57 : vector<8x256xi1>, vector<8x256xf32>
    %c0_16 = arith.constant 0 : index
    %c3 = arith.constant 3 : index
    %59 = vector.load %arg2[%c0_16, %c3] : memref<8x9xf32, #tpu.memory_space<vmem>>, vector<8x1xf32>
    %60 = vector.broadcast %59 : vector<8x1xf32> to vector<8x256xf32>
    %61 = arith.mulf %58, %60 : vector<8x256xf32>
    %62 = arith.addf %53, %61 : vector<8x256xf32>
    %c0_17 = arith.constant 0 : index
    %c4 = arith.constant 4 : index
    %63 = vector.load %arg2[%c0_17, %c4] : memref<8x9xf32, #tpu.memory_space<vmem>>, vector<8x1xf32>
    %64 = vector.broadcast %63 : vector<8x1xf32> to vector<8x256xf32>
    %65 = arith.mulf %0, %64 : vector<8x256xf32>
    %66 = arith.addf %62, %65 : vector<8x256xf32>
    %c255_i32 = arith.constant 255 : i32
    %67 = tpu.dynamic_rotate %0 by %c255_i32 dim 1 : vector<8x256xf32>, i32 -> vector<8x256xf32>
    %cst_18 = arith.constant 0.000000e+00 : f32
    %68 = vector.shape_cast %25 : vector<1x256xi1> to vector<1x256xi1>
    %69 = vector.broadcast %68 : vector<1x256xi1> to vector<8x256xi1>
    %70 = vector.broadcast %cst_18 : f32 to vector<8x256xf32>
    %71 = arith.select %69, %67, %70 : vector<8x256xi1>, vector<8x256xf32>
    %c0_19 = arith.constant 0 : index
    %c5 = arith.constant 5 : index
    %72 = vector.load %arg2[%c0_19, %c5] : memref<8x9xf32, #tpu.memory_space<vmem>>, vector<8x1xf32>
    %73 = vector.broadcast %72 : vector<8x1xf32> to vector<8x256xf32>
    %74 = arith.mulf %71, %73 : vector<8x256xf32>
    %75 = arith.addf %66, %74 : vector<8x256xf32>
    %c241_i32 = arith.constant 241 : i32
    %76 = tpu.dynamic_rotate %0 by %c241_i32 dim 1 : vector<8x256xf32>, i32 -> vector<8x256xf32>
    %77 = arith.andi %21, %23 : vector<1x256xi1>
    %cst_20 = arith.constant 0.000000e+00 : f32
    %78 = vector.shape_cast %77 : vector<1x256xi1> to vector<1x256xi1>
    %79 = vector.broadcast %78 : vector<1x256xi1> to vector<8x256xi1>
    %80 = vector.broadcast %cst_20 : f32 to vector<8x256xf32>
    %81 = arith.select %79, %76, %80 : vector<8x256xi1>, vector<8x256xf32>
    %c0_21 = arith.constant 0 : index
    %c6 = arith.constant 6 : index
    %82 = vector.load %arg2[%c0_21, %c6] : memref<8x9xf32, #tpu.memory_space<vmem>>, vector<8x1xf32>
    %83 = vector.broadcast %82 : vector<8x1xf32> to vector<8x256xf32>
    %84 = arith.mulf %81, %83 : vector<8x256xf32>
    %85 = arith.addf %75, %84 : vector<8x256xf32>
    %c240_i32_22 = arith.constant 240 : i32
    %86 = tpu.dynamic_rotate %0 by %c240_i32_22 dim 1 : vector<8x256xf32>, i32 -> vector<8x256xf32>
    %cst_23 = arith.constant 0.000000e+00 : f32
    %87 = vector.shape_cast %21 : vector<1x256xi1> to vector<1x256xi1>
    %88 = vector.broadcast %87 : vector<1x256xi1> to vector<8x256xi1>
    %89 = vector.broadcast %cst_23 : f32 to vector<8x256xf32>
    %90 = arith.select %88, %86, %89 : vector<8x256xi1>, vector<8x256xf32>
    %c0_24 = arith.constant 0 : index
    %c7 = arith.constant 7 : index
    %91 = vector.load %arg2[%c0_24, %c7] : memref<8x9xf32, #tpu.memory_space<vmem>>, vector<8x1xf32>
    %92 = vector.broadcast %91 : vector<8x1xf32> to vector<8x256xf32>
    %93 = arith.mulf %90, %92 : vector<8x256xf32>
    %94 = arith.addf %85, %93 : vector<8x256xf32>
    %c239_i32 = arith.constant 239 : i32
    %95 = tpu.dynamic_rotate %0 by %c239_i32 dim 1 : vector<8x256xf32>, i32 -> vector<8x256xf32>
    %96 = arith.andi %21, %25 : vector<1x256xi1>
    %cst_25 = arith.constant 0.000000e+00 : f32
    %97 = vector.shape_cast %96 : vector<1x256xi1> to vector<1x256xi1>
    %98 = vector.broadcast %97 : vector<1x256xi1> to vector<8x256xi1>
    %99 = vector.broadcast %cst_25 : f32 to vector<8x256xf32>
    %100 = arith.select %98, %95, %99 : vector<8x256xi1>, vector<8x256xf32>
    %c0_26 = arith.constant 0 : index
    %c8 = arith.constant 8 : index
    %101 = vector.load %arg2[%c0_26, %c8] : memref<8x9xf32, #tpu.memory_space<vmem>>, vector<8x1xf32>
    %102 = vector.broadcast %101 : vector<8x1xf32> to vector<8x256xf32>
    %103 = arith.mulf %100, %102 : vector<8x256xf32>
    %104 = arith.addf %94, %103 : vector<8x256xf32>
    %c0_27 = arith.constant 0 : index
    %c0_28 = arith.constant 0 : index
    %105 = vector.load %arg3[%c0_27, %c0_28] : memref<8x4xf32, #tpu.memory_space<vmem>>, vector<8x4xf32>
    %c0_29 = arith.constant 0 : index
    %c0_30 = arith.constant 0 : index
    %106 = vector.load %arg4[%c0_29, %c0_30] : memref<8x1xf32, #tpu.memory_space<vmem>>, vector<8x1xf32>
    %107 = vector.extract_strided_slice %104 {offsets = [0, 0], sizes = [4, 256], strides = [1, 1]} : vector<8x256xf32> to vector<4x256xf32>
    %108 = vector.extract_strided_slice %105 {offsets = [0, 0], sizes = [8, 1], strides = [1, 1]} : vector<8x4xf32> to vector<8x1xf32>
    %109 = vector.extract_strided_slice %107 {offsets = [0, 0], sizes = [1, 256], strides = [1, 1]} : vector<4x256xf32> to vector<1x256xf32>
    %110 = vector.broadcast %108 : vector<8x1xf32> to vector<8x256xf32>
    %111 = vector.broadcast %109 : vector<1x256xf32> to vector<8x256xf32>
    %112 = arith.mulf %110, %111 : vector<8x256xf32>
    %113 = vector.extract_strided_slice %105 {offsets = [0, 1], sizes = [8, 1], strides = [1, 1]} : vector<8x4xf32> to vector<8x1xf32>
    %114 = vector.extract_strided_slice %107 {offsets = [1, 0], sizes = [1, 256], strides = [1, 1]} : vector<4x256xf32> to vector<1x256xf32>
    %115 = vector.broadcast %113 : vector<8x1xf32> to vector<8x256xf32>
    %116 = vector.broadcast %114 : vector<1x256xf32> to vector<8x256xf32>
    %117 = arith.mulf %115, %116 : vector<8x256xf32>
    %118 = arith.addf %112, %117 : vector<8x256xf32>
    %119 = vector.extract_strided_slice %105 {offsets = [0, 2], sizes = [8, 1], strides = [1, 1]} : vector<8x4xf32> to vector<8x1xf32>
    %120 = vector.extract_strided_slice %107 {offsets = [2, 0], sizes = [1, 256], strides = [1, 1]} : vector<4x256xf32> to vector<1x256xf32>
    %121 = vector.broadcast %119 : vector<8x1xf32> to vector<8x256xf32>
    %122 = vector.broadcast %120 : vector<1x256xf32> to vector<8x256xf32>
    %123 = arith.mulf %121, %122 : vector<8x256xf32>
    %124 = arith.addf %118, %123 : vector<8x256xf32>
    %125 = vector.extract_strided_slice %105 {offsets = [0, 3], sizes = [8, 1], strides = [1, 1]} : vector<8x4xf32> to vector<8x1xf32>
    %126 = vector.extract_strided_slice %107 {offsets = [3, 0], sizes = [1, 256], strides = [1, 1]} : vector<4x256xf32> to vector<1x256xf32>
    %127 = vector.broadcast %125 : vector<8x1xf32> to vector<8x256xf32>
    %128 = vector.broadcast %126 : vector<1x256xf32> to vector<8x256xf32>
    %129 = arith.mulf %127, %128 : vector<8x256xf32>
    %130 = arith.addf %124, %129 : vector<8x256xf32>
    %131 = vector.broadcast %106 : vector<8x1xf32> to vector<8x256xf32>
    %132 = arith.addf %130, %131 : vector<8x256xf32>
    %cst_31 = arith.constant 0.000000e+00 : f32
    %133 = vector.broadcast %cst_31 : f32 to vector<8x256xf32>
    %134 = arith.maximumf %132, %133 : vector<8x256xf32>
    %c0_32 = arith.constant 0 : index
    %c0_33 = arith.constant 0 : index
    %135 = vector.load %arg5[%c0_32, %c0_33] : memref<16x256xf32, #tpu.memory_space<vmem>>, vector<8x256xf32>
    tpu.vector_store %arg5[%c0_32, %c0_33], %134 {strides = array<i32>} : memref<16x256xf32, #tpu.memory_space<vmem>>, vector<8x256xf32>,
    %136 = vector.extract_strided_slice %104 {offsets = [4, 0], sizes = [4, 256], strides = [1, 1]} : vector<8x256xf32> to vector<4x256xf32>
    %137 = vector.extract_strided_slice %105 {offsets = [0, 0], sizes = [8, 1], strides = [1, 1]} : vector<8x4xf32> to vector<8x1xf32>
    %138 = vector.extract_strided_slice %136 {offsets = [0, 0], sizes = [1, 256], strides = [1, 1]} : vector<4x256xf32> to vector<1x256xf32>
    %139 = vector.broadcast %137 : vector<8x1xf32> to vector<8x256xf32>
    %140 = vector.broadcast %138 : vector<1x256xf32> to vector<8x256xf32>
    %141 = arith.mulf %139, %140 : vector<8x256xf32>
    %142 = vector.extract_strided_slice %105 {offsets = [0, 1], sizes = [8, 1], strides = [1, 1]} : vector<8x4xf32> to vector<8x1xf32>
    %143 = vector.extract_strided_slice %136 {offsets = [1, 0], sizes = [1, 256], strides = [1, 1]} : vector<4x256xf32> to vector<1x256xf32>
    %144 = vector.broadcast %142 : vector<8x1xf32> to vector<8x256xf32>
    %145 = vector.broadcast %143 : vector<1x256xf32> to vector<8x256xf32>
    %146 = arith.mulf %144, %145 : vector<8x256xf32>
    %147 = arith.addf %141, %146 : vector<8x256xf32>
    %148 = vector.extract_strided_slice %105 {offsets = [0, 2], sizes = [8, 1], strides = [1, 1]} : vector<8x4xf32> to vector<8x1xf32>
    %149 = vector.extract_strided_slice %136 {offsets = [2, 0], sizes = [1, 256], strides = [1, 1]} : vector<4x256xf32> to vector<1x256xf32>
    %150 = vector.broadcast %148 : vector<8x1xf32> to vector<8x256xf32>
    %151 = vector.broadcast %149 : vector<1x256xf32> to vector<8x256xf32>
    %152 = arith.mulf %150, %151 : vector<8x256xf32>
    %153 = arith.addf %147, %152 : vector<8x256xf32>
    %154 = vector.extract_strided_slice %105 {offsets = [0, 3], sizes = [8, 1], strides = [1, 1]} : vector<8x4xf32> to vector<8x1xf32>
    %155 = vector.extract_strided_slice %136 {offsets = [3, 0], sizes = [1, 256], strides = [1, 1]} : vector<4x256xf32> to vector<1x256xf32>
    %156 = vector.broadcast %154 : vector<8x1xf32> to vector<8x256xf32>
    %157 = vector.broadcast %155 : vector<1x256xf32> to vector<8x256xf32>
    %158 = arith.mulf %156, %157 : vector<8x256xf32>
    %159 = arith.addf %153, %158 : vector<8x256xf32>
    %160 = vector.broadcast %106 : vector<8x1xf32> to vector<8x256xf32>
    %161 = arith.addf %159, %160 : vector<8x256xf32>
    %cst_34 = arith.constant 0.000000e+00 : f32
    %162 = vector.broadcast %cst_34 : f32 to vector<8x256xf32>
    %163 = arith.maximumf %161, %162 : vector<8x256xf32>
    %c8_35 = arith.constant 8 : index
    %c0_36 = arith.constant 0 : index
    %164 = vector.load %arg5[%c8_35, %c0_36] : memref<16x256xf32, #tpu.memory_space<vmem>>, vector<8x256xf32>
    tpu.vector_store %arg5[%c8_35, %c0_36], %163 {strides = array<i32>} : memref<16x256xf32, #tpu.memory_space<vmem>>, vector<8x256xf32>,
    return
  }
  func.func @transform_0(%arg0: i32) -> (i32, i32) {
    %c0_i32 = arith.constant 0 : i32
    %c0_i32_0 = arith.constant 0 : i32
    return %arg0, %c0_i32 : i32, i32
  }
  func.func @transform_1(%arg0: i32) -> (i32, i32) {
    %c0_i32 = arith.constant 0 : i32
    %c0_i32_0 = arith.constant 0 : i32
    %c0_i32_1 = arith.constant 0 : i32
    return %c0_i32, %c0_i32_0 : i32, i32
  }
  func.func @transform_2(%arg0: i32) -> (i32, i32) {
    %c0_i32 = arith.constant 0 : i32
    %c0_i32_0 = arith.constant 0 : i32
    %c0_i32_1 = arith.constant 0 : i32
    return %c0_i32, %c0_i32_0 : i32, i32
  }
  func.func @transform_3(%arg0: i32) -> (i32, i32) {
    %c0_i32 = arith.constant 0 : i32
    %c0_i32_0 = arith.constant 0 : i32
    %c0_i32_1 = arith.constant 0 : i32
    return %c0_i32, %c0_i32_0 : i32, i32
  }
  func.func @transform_4(%arg0: i32) -> (i32, i32) {
    %c0_i32 = arith.constant 0 : i32
    %c0_i32_0 = arith.constant 0 : i32
    return %arg0, %c0_i32 : i32, i32
  }
}

</mosaic_0001>

<llo_original>
// kernel: tpu_custom_call.1
$region0: #{tpu_custom_call.1}
  #allocation0 [shape = 'u32[]', space=smem, size = 0x4, offset = 0x4, fixed_abs, tag = 'smem constant byte address 0x4 - core index']
  #allocation1 [shape = 'u32[144,128]{1,0:T(1,128)}', space=vmem, size = 0x12000, scoped, tag = 'internal scratch']
  %s0 = inlined_call_operand.vmem [shape: f32[8,256], index: 0, kind: input, shape index: {}]
  %s1 = inlined_call_operand.hbm [shape: f32[8,9], index: 1, kind: input, shape index: {}]
  %s2 = inlined_call_operand.vmem [shape: f32[8,4], index: 2, kind: input, shape index: {}]
  %s3 = inlined_call_operand.vmem [shape: f32[8,1], index: 3, kind: input, shape index: {}]
  %s4 = inlined_call_operand.hbm [shape: f32[16,256], index: 4, kind: output, shape index: {}]
  %s5 = sld [smem:[#allocation0]]
  $region30: #{tpu_custom_call.1} parent=0
    _
  %s7 = ssub.s32 1, %s5
  %s8 = scalar_select 0, %s7, %s5
  $region1: #{tpu_custom_call.1} parent=0
    #allocation2 [shape = 'u8[4096]{0}', space=vmem, size = 0x1000, scoped, tag = 'input window, operand 1, single buffered']
    #allocation3 [shape = 's32[1]{0}', space=sflag, size = 0x4, scoped, tag = 'scoped memory for tpu_custom_call.1']
    #allocation4 [shape = 's32[1]{0}', space=sflag, size = 0x4, scoped, tag = 'scoped memory for tpu_custom_call.1']
    #allocation5 [shape = 'u8[16384]{0}', space=vmem, size = 0x4000, scoped, tag = 'output window, operand 0, single buffered']
    %9 = vsyncpa [#allocation3], 0
    %10 = vsyncpa [#allocation4], 0
    // Predicated region
    $region2: #{tpu_custom_call.1} parent=1 // pred_check
      _
    $region3: #{tpu_custom_call.1} parent=1 // pred_check_branch
      %12 = sbr.rel (0) target = $region5
    $region4: #{tpu_custom_call.1} parent=1 // pred_region
      _
    $region5: #{tpu_custom_call.1} parent=1 // pred_fallthru
      _
    // Predicated region
    $region6: #{tpu_custom_call.1} parent=1 // pred_check
      _
    $region7: #{tpu_custom_call.1} parent=1 // pred_check_branch
      %14 = sbr.rel (0) target = $region9
    $region8: #{tpu_custom_call.1} parent=1 // pred_region
      %s16 = ssub.s32 128, 128
      %17 = vsyncadd [#allocation3], %s16
      %s19 = sshll.u32 [#allocation2], 4
      %s20 = int_to_ptr.vmem [resolvable:$true] %s19
      %22 = dma.hbm_to_vmem [thread:$0]  %s1, 128, %s20, [#allocation3]
    $region9: #{tpu_custom_call.1} parent=1 // pred_fallthru
      _
    // Predicated region
    $region10: #{tpu_custom_call.1} parent=1 // pred_check
      _
    $region11: #{tpu_custom_call.1} parent=1 // pred_check_branch
      %24 = sbr.rel (0) target = $region13
    $region12: #{tpu_custom_call.1} parent=1 // pred_region
      _
    $region13: #{tpu_custom_call.1} parent=1 // pred_fallthru
      _
    // Predicated region
    $region14: #{tpu_custom_call.1} parent=1 // pred_check
      _
    $region15: #{tpu_custom_call.1} parent=1 // pred_check_branch
      %26 = sbr.rel (0) target = $region17
    $region16: #{tpu_custom_call.1} parent=1 // pred_region
      _
    $region17: #{tpu_custom_call.1} parent=1 // pred_fallthru
      _
    // Predicated region
    $region18: #{tpu_custom_call.1} parent=1 // pred_check
      _
    $region19: #{tpu_custom_call.1} parent=1 // pred_check_branch
      %28 = sbr.rel (0) target = $region21
    $region20: #{tpu_custom_call.1} parent=1 // pred_region
      %29 = dma.done [#allocation3], 128
    $region21: #{tpu_custom_call.1} parent=1 // pred_fallthru
      _
    %v30 = vld [vmem:[%s0] sm:$0xff]
    %v31 = vld [vmem:[%s0 + $0x8] sm:$0xff]
    %v32 = vlaneseq
    %v33 = vand.u32 %v32, 127
    %v34 = vadd.s32 %v33, 128
    %vm35 = vcmp.lt.s32.totalorder %v33, 0
    %v36 = vsub.s32 0, %v33
    %v37 = vsel %vm35, %v36, %v33
    %v38 = vshrl.u32 %v37, 4
    %v39 = vand.u32 %v37, 15
    %v40 = vsub.s32 0, %v39
    %v41 = vsel %vm35, %v40, %v39
    %vm42 = vcmp.lt.s32.totalorder %v34, 0
    %v43 = vsub.s32 0, %v34
    %v44 = vsel %vm42, %v43, %v34
    %v45 = vshrl.u32 %v44, 4
    %v46 = vand.u32 %v44, 15
    %v47 = vsub.s32 0, %v46
    %v48 = vsel %vm42, %v47, %v46
    %vm49 = vcmp.ne.s32.totalorder %v41, 0
    %vm50 = vcmp.ne.s32.totalorder %v48, 0
    %vm51 = vcmp.lt.s32.totalorder %v41, 0
    %vm52 = vcmp.lt.s32.totalorder %v48, 0
    %vm53 = vmand %vm51, %vm49
    %vm54 = vmand %vm52, %vm50
    %v55 = vadd.s32 %v41, 16
    %v56 = vadd.s32 %v48, 16
    %v57 = vsel %vm53, %v55, %v41
    %v58 = vsel %vm54, %v56, %v48
    %vm59 = vcmp.ge.s32.totalorder %v33, 16
    %vm60 = vcmp.ge.s32.totalorder %v34, 16
    %vm61 = vcmp.lt.s32.totalorder %v33, 240
    %vm62 = vcmp.lt.s32.totalorder %v34, 240
    %vm63 = vcmp.ge.s32.totalorder %v57, 1
    %vm64 = vcmp.ge.s32.totalorder %v58, 1
    %vm65 = vcmp.lt.s32.totalorder %v57, 15
    %vm66 = vcmp.lt.s32.totalorder %v58, 15
    %67 = vrot.lane.b32.xlu0 %v30, 17
    %v68 = vpop.permute.xlu0 %67
    %69 = vrot.lane.b32.xlu0 %v31, 17
    %v70 = vpop.permute.xlu0 %69
    %vm71 = vcmp.lt.s32.totalorder %v33, 17
    %v72 = vsel %vm71, %v68, %v70
    %v73 = vsel %vm71, %v70, %v68
    %vm74 = vmand %vm59, %vm63
    %vm75 = vmand %vm60, %vm64
    %v76 = vsel %vm74, 1, 0
    %v77 = vsel %vm75, 1, 0
    %vm78 = vcmp.eq.s32.totalorder %v76, 1
    %vm79 = vcmp.eq.s32.totalorder %v77, 1
    %v80 = vsel %vm78, %v73, 0.0
    %v81 = vsel %vm79, %v72, 0.0
    %v82 = vld [vmem:[#allocation2] sm:$0xff]
    %84 = vset.pattern.permute.xlu0 0
    %85 = vperm.xlu0 %84, %v82
    %v86 = vpop.permute.xlu0 %85
    %v88 = vmul.f32 %v80, %v86
    %v89 = vmul.f32 %v81, %v86
    %90 = vrot.lane.b32.xlu0 %v30, 16
    %v91 = vpop.permute.xlu0 %90
    %92 = vrot.lane.b32.xlu0 %v31, 16
    %v93 = vpop.permute.xlu0 %92
    %vm94 = vcmp.lt.s32.totalorder %v33, 16
    %v95 = vsel %vm94, %v91, %v93
    %v96 = vsel %vm94, %v93, %v91
    %v97 = vsel %vm59, 1, 0
    %v98 = vsel %vm60, 1, 0
    %vm99 = vcmp.eq.s32.totalorder %v97, 1
    %vm100 = vcmp.eq.s32.totalorder %v98, 1
    %v101 = vsel %vm99, %v96, 0.0
    %v102 = vsel %vm100, %v95, 0.0
    %103 = vset.pattern.permute.xlu0 1
    %104 = vperm.xlu0 %103, %v82
    %v105 = vpop.permute.xlu0 %104
    %v107 = vmul.f32 %v101, %v105
    %v108 = vmul.f32 %v102, %v105
    %v109 = vadd.f32 %v88, %v107
    %v110 = vadd.f32 %v89, %v108
    %111 = vrot.lane.b32.xlu0 %v30, 15
    %v112 = vpop.permute.xlu0 %111
    %113 = vrot.lane.b32.xlu0 %v31, 15
    %v114 = vpop.permute.xlu0 %113
    %vm115 = vcmp.lt.s32.totalorder %v33, 15
    %v116 = vsel %vm115, %v112, %v114
    %v117 = vsel %vm115, %v114, %v112
    %vm118 = vmand %vm59, %vm65
    %vm119 = vmand %vm60, %vm66
    %v120 = vsel %vm118, 1, 0
    %v121 = vsel %vm119, 1, 0
    %vm122 = vcmp.eq.s32.totalorder %v120, 1
    %vm123 = vcmp.eq.s32.totalorder %v121, 1
    %v124 = vsel %vm122, %v117, 0.0
    %v125 = vsel %vm123, %v116, 0.0
    %126 = vset.pattern.permute.xlu0 2
    %127 = vperm.xlu0 %126, %v82
    %v128 = vpop.permute.xlu0 %127
    %v130 = vmul.f32 %v124, %v128
    %v131 = vmul.f32 %v125, %v128
    %v132 = vadd.f32 %v109, %v130
    %v133 = vadd.f32 %v110, %v131
    %134 = vrot.lane.b32.xlu0 %v30, 1
    %v135 = vpop.permute.xlu0 %134
    %136 = vrot.lane.b32.xlu0 %v31, 1
    %v137 = vpop.permute.xlu0 %136
    %vm138 = vcmp.lt.s32.totalorder %v33, 1
    %v139 = vsel %vm138, %v135, %v137
    %v140 = vsel %vm138, %v137, %v135
    %v141 = vsel %vm63, 1, 0
    %v142 = vsel %vm64, 1, 0
    %vm143 = vcmp.eq.s32.totalorder %v141, 1
    %vm144 = vcmp.eq.s32.totalorder %v142, 1
    %v145 = vsel %vm143, %v140, 0.0
    %v146 = vsel %vm144, %v139, 0.0
    %147 = vset.pattern.permute.xlu0 3
    %148 = vperm.xlu0 %147, %v82
    %v149 = vpop.permute.xlu0 %148
    %v151 = vmul.f32 %v145, %v149
    %v152 = vmul.f32 %v146, %v149
    %v153 = vadd.f32 %v132, %v151
    %v154 = vadd.f32 %v133, %v152
    %155 = vset.pattern.permute.xlu0 4
    %156 = vperm.xlu0 %155, %v82
    %v157 = vpop.permute.xlu0 %156
    %v159 = vmul.f32 %v30, %v157
    %v160 = vmul.f32 %v31, %v157
    %v161 = vadd.f32 %v153, %v159
    %v162 = vadd.f32 %v154, %v160
    %163 = vrot.lane.b32.xlu0 %v30, 127
    %v164 = vpop.permute.xlu0 %163
    %165 = vrot.lane.b32.xlu0 %v31, 127
    %v166 = vpop.permute.xlu0 %165
    %vm167 = vcmp.lt.s32.totalorder %v33, 127
    %v168 = vsel %vm167, %v164, %v166
    %v169 = vsel %vm167, %v166, %v164
    %v170 = vsel %vm65, 1, 0
    %v171 = vsel %vm66, 1, 0
    %vm172 = vcmp.eq.s32.totalorder %v170, 1
    %vm173 = vcmp.eq.s32.totalorder %v171, 1
    %v174 = vsel %vm172, %v168, 0.0
    %v175 = vsel %vm173, %v169, 0.0
    %176 = vset.pattern.permute.xlu0 5
    %177 = vperm.xlu0 %176, %v82
    %v178 = vpop.permute.xlu0 %177
    %v180 = vmul.f32 %v174, %v178
    %v181 = vmul.f32 %v175, %v178
    %v182 = vadd.f32 %v161, %v180
    %v183 = vadd.f32 %v162, %v181
    %184 = vrot.lane.b32.xlu0 %v30, 113
    %v185 = vpop.permute.xlu0 %184
    %186 = vrot.lane.b32.xlu0 %v31, 113
    %v187 = vpop.permute.xlu0 %186
    %vm188 = vcmp.lt.s32.totalorder %v33, 113
    %v189 = vsel %vm188, %v185, %v187
    %v190 = vsel %vm188, %v187, %v185
    %vm191 = vmand %vm61, %vm63
    %vm192 = vmand %vm62, %vm64
    %v193 = vsel %vm191, 1, 0
    %v194 = vsel %vm192, 1, 0
    %vm195 = vcmp.eq.s32.totalorder %v193, 1
    %vm196 = vcmp.eq.s32.totalorder %v194, 1
    %v197 = vsel %vm195, %v189, 0.0
    %v198 = vsel %vm196, %v190, 0.0
    %199 = vset.pattern.permute.xlu0 6
    %200 = vperm.xlu0 %199, %v82
    %v201 = vpop.permute.xlu0 %200
    %v203 = vmul.f32 %v197, %v201
    %v204 = vmul.f32 %v198, %v201
    %v205 = vadd.f32 %v182, %v203
    %v206 = vadd.f32 %v183, %v204
    %207 = vrot.lane.b32.xlu0 %v30, 112
    %v208 = vpop.permute.xlu0 %207
    %209 = vrot.lane.b32.xlu0 %v31, 112
    %v210 = vpop.permute.xlu0 %209
    %vm211 = vcmp.lt.s32.totalorder %v33, 112
    %v212 = vsel %vm211, %v208, %v210
    %v213 = vsel %vm211, %v210, %v208
    %v214 = vsel %vm61, 1, 0
    %v215 = vsel %vm62, 1, 0
    %vm216 = vcmp.eq.s32.totalorder %v214, 1
    %vm217 = vcmp.eq.s32.totalorder %v215, 1
    %v218 = vsel %vm216, %v212, 0.0
    %v219 = vsel %vm217, %v213, 0.0
    %220 = vset.pattern.permute.xlu0 7
    %221 = vperm.xlu0 %220, %v82
    %v222 = vpop.permute.xlu0 %221
    %v224 = vmul.f32 %v218, %v222
    %v225 = vmul.f32 %v219, %v222
    %v226 = vadd.f32 %v205, %v224
    %v227 = vadd.f32 %v206, %v225
    %228 = vrot.lane.b32.xlu0 %v30, 111
    %v229 = vpop.permute.xlu0 %228
    %230 = vrot.lane.b32.xlu0 %v31, 111
    %v231 = vpop.permute.xlu0 %230
    %vm232 = vcmp.lt.s32.totalorder %v33, 111
    %v233 = vsel %vm232, %v229, %v231
    %v234 = vsel %vm232, %v231, %v229
    %vm235 = vmand %vm61, %vm65
    %vm236 = vmand %vm62, %vm66
    %v237 = vsel %vm235, 1, 0
    %v238 = vsel %vm236, 1, 0
    %vm239 = vcmp.eq.s32.totalorder %v237, 1
    %vm240 = vcmp.eq.s32.totalorder %v238, 1
    %v241 = vsel %vm239, %v233, 0.0
    %v242 = vsel %vm240, %v234, 0.0
    %243 = vset.pattern.permute.xlu0 8
    %244 = vperm.xlu0 %243, %v82
    %v245 = vpop.permute.xlu0 %244
    %v247 = vmul.f32 %v241, %v245
    %v248 = vmul.f32 %v242, %v245
    %v249 = vadd.f32 %v226, %v247
    %v250 = vadd.f32 %v227, %v248
    %v251 = vld [vmem:[%s2] sm:$0xff]
    %v252 = vld [vmem:[%s3] sm:$0xff]
    %254 = vset.pattern.permute.xlu0 0
    %255 = vperm.xlu0 %254, %v251
    %v256 = vpop.permute.xlu0 %255
    %v258 = vlaneseq
    %v259 = vshrl.u32 %v258, 7
    %v260 = vsub.s32 0, %v259
    %v261 = vrot.slane %v249, %v260
    %v262 = vlaneseq
    %v263 = vshrl.u32 %v262, 7
    %v264 = vsub.s32 0, %v263
    %v265 = vrot.slane %v250, %v264
    %v266 = vmul.f32 %v256, %v261
    %v267 = vmul.f32 %v256, %v265
    %268 = vset.pattern.permute.xlu0 1
    %269 = vperm.xlu0 %268, %v251
    %v270 = vpop.permute.xlu0 %269
    %v272 = vlaneseq
    %v273 = vshrl.u32 %v272, 7
    %v274 = vsub.s32 1, %v273
    %v275 = vrot.slane %v249, %v274
    %v276 = vlaneseq
    %v277 = vshrl.u32 %v276, 7
    %v278 = vsub.s32 1, %v277
    %v279 = vrot.slane %v250, %v278
    %v280 = vmul.f32 %v270, %v275
    %v281 = vmul.f32 %v270, %v279
    %v282 = vadd.f32 %v266, %v280
    %v283 = vadd.f32 %v267, %v281
    %284 = vset.pattern.permute.xlu0 2
    %285 = vperm.xlu0 %284, %v251
    %v286 = vpop.permute.xlu0 %285
    %v288 = vlaneseq
    %v289 = vshrl.u32 %v288, 7
    %v290 = vsub.s32 2, %v289
    %v291 = vrot.slane %v249, %v290
    %v292 = vlaneseq
    %v293 = vshrl.u32 %v292, 7
    %v294 = vsub.s32 2, %v293
    %v295 = vrot.slane %v250, %v294
    %v296 = vmul.f32 %v286, %v291
    %v297 = vmul.f32 %v286, %v295
    %v298 = vadd.f32 %v282, %v296
    %v299 = vadd.f32 %v283, %v297
    %300 = vset.pattern.permute.xlu0 3
    %301 = vperm.xlu0 %300, %v251
    %v302 = vpop.permute.xlu0 %301
    %v304 = vlaneseq
    %v305 = vshrl.u32 %v304, 7
    %v306 = vsub.s32 3, %v305
    %v307 = vrot.slane %v249, %v306
    %v308 = vlaneseq
    %v309 = vshrl.u32 %v308, 7
    %v310 = vsub.s32 3, %v309
    %v311 = vrot.slane %v250, %v310
    %v312 = vmul.f32 %v302, %v307
    %v313 = vmul.f32 %v302, %v311
    %v314 = vadd.f32 %v298, %v312
    %v315 = vadd.f32 %v299, %v313
    %317 = vset.pattern.permute.xlu0 0
    %318 = vperm.xlu0 %317, %v252
    %v319 = vpop.permute.xlu0 %318
    %v321 = vadd.f32 %v314, %v319
    %v322 = vadd.f32 %v315, %v319
    %v323 = vmax.f32 %v321, 0.0
    %v324 = vmax.f32 %v322, 0.0
    %325 = vst [vmem:[#allocation5] sm:$0xff] %v323
    %326 = vst [vmem:[#allocation5 + $0x8] sm:$0xff] %v324
    %v327 = vlaneseq
    %v328 = vshrl.u32 %v327, 7
    %v329 = vsub.s32 4, %v328
    %v330 = vrot.slane %v249, %v329
    %v331 = vlaneseq
    %v332 = vshrl.u32 %v331, 7
    %v333 = vsub.s32 4, %v332
    %v334 = vrot.slane %v250, %v333
    %v335 = vmul.f32 %v256, %v330
    %v336 = vmul.f32 %v256, %v334
    %v337 = vlaneseq
    %v338 = vshrl.u32 %v337, 7
    %v339 = vsub.s32 5, %v338
    %v340 = vrot.slane %v249, %v339
    %v341 = vlaneseq
    %v342 = vshrl.u32 %v341, 7
    %v343 = vsub.s32 5, %v342
    %v344 = vrot.slane %v250, %v343
    %v345 = vmul.f32 %v270, %v340
    %v346 = vmul.f32 %v270, %v344
    %v347 = vadd.f32 %v335, %v345
    %v348 = vadd.f32 %v336, %v346
    %v349 = vlaneseq
    %v350 = vshrl.u32 %v349, 7
    %v351 = vsub.s32 6, %v350
    %v352 = vrot.slane %v249, %v351
    %v353 = vlaneseq
    %v354 = vshrl.u32 %v353, 7
    %v355 = vsub.s32 6, %v354
    %v356 = vrot.slane %v250, %v355
    %v357 = vmul.f32 %v286, %v352
    %v358 = vmul.f32 %v286, %v356
    %v359 = vadd.f32 %v347, %v357
    %v360 = vadd.f32 %v348, %v358
    %v361 = vlaneseq
    %v362 = vshrl.u32 %v361, 7
    %v363 = vsub.s32 7, %v362
    %v364 = vrot.slane %v249, %v363
    %v365 = vlaneseq
    %v366 = vshrl.u32 %v365, 7
    %v367 = vsub.s32 7, %v366
    %v368 = vrot.slane %v250, %v367
    %v369 = vmul.f32 %v302, %v364
    %v370 = vmul.f32 %v302, %v368
    %v371 = vadd.f32 %v359, %v369
    %v372 = vadd.f32 %v360, %v370
    %v373 = vadd.f32 %v371, %v319
    %v374 = vadd.f32 %v372, %v319
    %v375 = vmax.f32 %v373, 0.0
    %v376 = vmax.f32 %v374, 0.0
    %377 = vst [vmem:[#allocation5 + $0x10] sm:$0xff] %v375
    %378 = vst [vmem:[#allocation5 + $0x18] sm:$0xff] %v376
    // Predicated region
    $region22: #{tpu_custom_call.1} parent=1 // pred_check
      _
    $region23: #{tpu_custom_call.1} parent=1 // pred_check_branch
      %380 = sbr.rel (0) target = $region25
    $region24: #{tpu_custom_call.1} parent=1 // pred_region
      %s382 = ssub.s32 512, 512
      %383 = vsyncadd [#allocation4], %s382
      %s384 = sshll.u32 [#allocation5], 4
      %s385 = int_to_ptr.vmem [resolvable:$true] %s384
      %390 = dma.vmem_to_hbm [thread:$0]  %s385, 512, %s4, [#allocation4], 256, 256, 16
    $region25: #{tpu_custom_call.1} parent=1 // pred_fallthru
      _
    // Predicated region
    $region26: #{tpu_custom_call.1} parent=1 // pred_check
      _
    $region27: #{tpu_custom_call.1} parent=1 // pred_check_branch
      %392 = sbr.rel (0) target = $region29
    $region28: #{tpu_custom_call.1} parent=1 // pred_region
      %393 = dma.done [#allocation4], 512
    $region29: #{tpu_custom_call.1} parent=1 // pred_fallthru
      _
    %394 = vsyncpa [#allocation3], 1
    %395 = vsyncpa [#allocation4], 1

</llo_original>
